<compile_context>
chip_gen: v7x
topology: tpu7x:2x2x1
jax: 0.10.0
libtpu: 0.0.40
codegen_flags: <defaults>
</compile_context>

<pallas_src>
import jax
import jax.numpy as jnp
from jax.experimental import pallas as pl
from jax.experimental.pallas import tpu as pltpu

H_P = 128      # padded hidden width (lane dim of h1/h2, K of layers 2 & 3)
M_P = 8        # padded head width (>= m = num actions)
VEC_ROWS = 8   # sublane-padded packed w1/b1/b2/b3 block


def _mlp_tile(x_ref, vecs_ref, w2_ref, w3_ref):
    # Packed rows: 0 = w1 row, 1 = b1, 2 = b2, 3 = b3 (all zero-padded).
    w1_row = vecs_ref[0:1, :]                 # (1, H_P) f32
    b1 = vecs_ref[1:2, :]                     # (1, H_P) f32
    b2 = vecs_ref[2:3, :]                     # (1, H_P) f32
    b3 = vecs_ref[3:4, :M_P]                  # (1, M_P) f32

    x = x_ref[...]                            # (TB, 1) f32
    # Layer 1 (in_dim == 1): broadcast multiply on the VPU, f32.
    h1 = jnp.maximum(x * w1_row + b1, 0.0)    # (TB, H_P)
    # Layer 2: bf16 MXU matmul, f32 accumulate; bias/ReLU in f32.
    h2 = jnp.dot(h1.astype(jnp.bfloat16), w2_ref[...],
                 preferred_element_type=jnp.float32)
    h2 = jnp.maximum(h2 + b2, 0.0)            # (TB, H_P)
    # Head: bf16 MXU matmul into the narrow padded action dim.
    out = jnp.dot(h2.astype(jnp.bfloat16), w3_ref[...],
                  preferred_element_type=jnp.float32)
    return out + b3                           # (TB, M_P) f32


def _dqn_kernel(x_ref, vecs_ref, w2_ref, w3_ref, o_ref):
    o_ref[...] = _mlp_tile(x_ref, vecs_ref, w2_ref, w3_ref).astype(o_ref.dtype)


def _dqn_kernel_eps(x_ref, vecs_ref, w2_ref, w3_ref, eps_ref, o_ref):
    out = _mlp_tile(x_ref, vecs_ref, w2_ref, w3_ref) + eps_ref[...]
    o_ref[...] = out.astype(o_ref.dtype)


def init_params(key, hidden=16, m=2):
    """Deterministic init mirroring nn.Linear default (uniform +-1/sqrt(fan_in)).
    Weights stored as (in_features, out_features)."""
    ks = jax.random.split(key, 6)

    def linear(kw, kb, fan_in, fan_out):
        bound = 1.0 / (fan_in ** 0.5)
        w = jax.random.uniform(kw, (fan_in, fan_out), jnp.float32, -bound, bound)
        b = jax.random.uniform(kb, (fan_out,), jnp.float32, -bound, bound)
        return w, b

    w1, b1 = linear(ks[0], ks[1], 1, hidden)
    w2, b2 = linear(ks[2], ks[3], hidden, hidden)
    w3, b3 = linear(ks[4], ks[5], hidden, m)
    return {"w1": w1, "b1": b1, "w2": w2, "b2": b2, "w3": w3, "b3": b3}


def prepare_params(params):
    """Pad / pack / cast weights once (hoisted out of the per-step forward)."""
    w1, b1 = params["w1"], params["b1"]
    w2, b2 = params["w2"], params["b2"]
    w3, b3 = params["w3"], params["b3"]
    hidden = w1.shape[1]
    m = w3.shape[1]
    assert w1.shape[0] == 1 and hidden <= H_P and m <= M_P

    vecs = jnp.zeros((VEC_ROWS, H_P), jnp.float32)
    vecs = vecs.at[0, :hidden].set(w1[0].astype(jnp.float32))
    vecs = vecs.at[1, :hidden].set(b1.astype(jnp.float32))
    vecs = vecs.at[2, :hidden].set(b2.astype(jnp.float32))
    vecs = vecs.at[3, :m].set(b3.astype(jnp.float32))

    w2_p = jnp.zeros((H_P, H_P), jnp.bfloat16)
    w2_p = w2_p.at[:hidden, :hidden].set(w2.astype(jnp.bfloat16))
    w3_p = jnp.zeros((H_P, M_P), jnp.bfloat16)
    w3_p = w3_p.at[:hidden, :m].set(w3.astype(jnp.bfloat16))

    return {"vecs": vecs, "w2": w2_p, "w3": w3_p, "m": m}


def dqn_forward(s, prepared, eps=None):
    """s: (B, 1) float32 states. prepared: output of prepare_params().
    eps: optional (B, m) noise for the sigma > 0 path. Returns (B, m) f32."""
    vecs, w2_p, w3_p, m = (prepared["vecs"], prepared["w2"],
                           prepared["w3"], prepared["m"])
    B = s.shape[0]

    B8 = ((B + 7) // 8) * 8
    TB = min(B8, 256)                       # row tile, multiple of 8
    B_P = ((B8 + TB - 1) // TB) * TB
    grid = (B_P // TB,)

    x_p = jnp.pad(s.astype(jnp.float32), ((0, B_P - B), (0, 0)))

    const = lambda i: (0, 0)
    row = lambda i: (i, 0)

    in_specs = [
        pl.BlockSpec((TB, 1), row),               # states
        pl.BlockSpec((VEC_ROWS, H_P), const),     # packed w1/b1/b2/b3
        pl.BlockSpec((H_P, H_P), const),          # w2 (bf16)
        pl.BlockSpec((H_P, M_P), const),          # w3 (bf16)
    ]
    operands = [x_p, vecs, w2_p, w3_p]
    kernel = _dqn_kernel

    if eps is not None:
        eps_p = jnp.pad(eps.astype(jnp.float32),
                        ((0, B_P - B), (0, M_P - eps.shape[1])))
        in_specs.append(pl.BlockSpec((TB, M_P), row))
        operands.append(eps_p)
        kernel = _dqn_kernel_eps

    out_p = pl.pallas_call(
        kernel,
        out_shape=jax.ShapeDtypeStruct((B_P, M_P), jnp.float32),
        grid=grid,
        in_specs=in_specs,
        out_specs=pl.BlockSpec((TB, M_P), row),
        compiler_params=pltpu.CompilerParams(
            dimension_semantics=("parallel",)),
    )(*operands)

    return out_p[:B, :m]


def reference_forward(s, params, eps=None):
    h1 = jnp.maximum(s @ params["w1"] + params["b1"], 0.0)
    h2 = jnp.maximum(h1 @ params["w2"] + params["b2"], 0.0)
    out = h2 @ params["w3"] + params["b3"]
    if eps is not None:
        out = out + eps
    return out


if __name__ == "__main__":
    key = jax.random.PRNGKey(0)
    pkey, skey, ekey = jax.random.split(key, 3)

    hidden = 16
    m = 2          # env.action_space.n == 2
    batch = 8      # batch of scalar states in [0, 1]

    params = init_params(pkey, hidden=hidden, m=m)
    prepared = prepare_params(params)      # padding/packing hoisted to init
    s = jax.random.uniform(skey, (batch, 1), jnp.float32, 0.0, 1.0)

    # sigma == 0 path (no eps operand at all).
    out = dqn_forward(s, prepared)
    jax.block_until_ready(out)
    ref = reference_forward(s, params)
    assert out.shape == (batch, m)
    # bf16 weights / activations at the MXU -> loosened tolerance.
    assert jnp.allclose(out, ref, atol=5e-2, rtol=5e-2)

    # sigma > 0 path with host-precomputed eps (noisebuffer surrogate).
    eps = 0.1 * jax.random.normal(ekey, (batch, m), jnp.float32)
    out_eps = dqn_forward(s, prepared, eps)
    jax.block_until_ready(out_eps)
    ref_eps = reference_forward(s, params, eps)
    assert jnp.allclose(out_eps, ref_eps, atol=5e-2, rtol=5e-2)

    print("KERNEL_OK")
</pallas_src>

<mosaic_0001>
module attributes {stable_mosaic.version = 11 : i64} {
  func.func @_dqn_kernel(%arg0: i32, %arg1: memref<8x1xf32, #tpu.memory_space<vmem>>, %arg2: memref<8x128xf32, #tpu.memory_space<vmem>>, %arg3: memref<128x128xbf16, #tpu.memory_space<vmem>>, %arg4: memref<128x8xbf16, #tpu.memory_space<vmem>>, %arg5: memref<8x8xf32, #tpu.memory_space<vmem>>) attributes {dimension_semantics = [#tpu.dimension_semantics<parallel>], iteration_bounds = array<i64: 1>, scalar_prefetch = 0 : i64, scratch_operands = 0 : i64, tpu.core_type = #tpu.core_type<tc>, window_params = [{transform_indices = @transform_0, window_bounds = array<i64: 8, 1>}, {pipeline_mode = #tpu.pipeline_mode<synchronous>, transform_indices = @transform_1, window_bounds = array<i64: 8, 128>}, {pipeline_mode = #tpu.pipeline_mode<synchronous>, transform_indices = @transform_2, window_bounds = array<i64: 128, 128>}, {pipeline_mode = #tpu.pipeline_mode<synchronous>, transform_indices = @transform_3, window_bounds = array<i64: 128, 8>}, {transform_indices = @transform_4, window_bounds = array<i64: 8, 8>}]} {
    %c0 = arith.constant 0 : index
    %c0_0 = arith.constant 0 : index
    %0 = vector.load %arg2[%c0, %c0_0] : memref<8x128xf32, #tpu.memory_space<vmem>>, vector<1x128xf32>
    %c1 = arith.constant 1 : index
    %c0_1 = arith.constant 0 : index
    %1 = vector.load %arg2[%c1, %c0_1] : memref<8x128xf32, #tpu.memory_space<vmem>>, vector<1x128xf32>
    %c2 = arith.constant 2 : index
    %c0_2 = arith.constant 0 : index
    %2 = vector.load %arg2[%c2, %c0_2] : memref<8x128xf32, #tpu.memory_space<vmem>>, vector<1x128xf32>
    %c3 = arith.constant 3 : index
    %c0_3 = arith.constant 0 : index
    %3 = vector.load %arg2[%c3, %c0_3] : memref<8x128xf32, #tpu.memory_space<vmem>>, vector<1x8xf32>
    %c0_4 = arith.constant 0 : index
    %c0_5 = arith.constant 0 : index
    %4 = vector.load %arg1[%c0_4, %c0_5] : memref<8x1xf32, #tpu.memory_space<vmem>>, vector<8x1xf32>
    %5 = vector.broadcast %4 : vector<8x1xf32> to vector<8x128xf32>
    %6 = vector.broadcast %0 : vector<1x128xf32> to vector<8x128xf32>
    %7 = arith.mulf %5, %6 : vector<8x128xf32>
    %8 = vector.broadcast %1 : vector<1x128xf32> to vector<8x128xf32>
    %9 = arith.addf %7, %8 : vector<8x128xf32>
    %cst = arith.constant 0.000000e+00 : f32
    %10 = vector.broadcast %cst : f32 to vector<8x128xf32>
    %11 = arith.maximumf %9, %10 : vector<8x128xf32>
    %12 = arith.truncf %11 : vector<8x128xf32> to vector<8x128xbf16>
    %c0_6 = arith.constant 0 : index
    %c0_7 = arith.constant 0 : index
    %13 = vector.load %arg3[%c0_6, %c0_7] : memref<128x128xbf16, #tpu.memory_space<vmem>>, vector<128x128xbf16>
    %cst_8 = arith.constant dense<0.000000e+00> : vector<8x128xf32>
    %14 = tpu.matmul %12, %13, %cst_8 {dimension_numbers = #tpu.dot_dimension_numbers<[1], [0], [0], [1], [0, 0, 1, 1], [], []>} : vector<8x128xbf16>, vector<128x128xbf16>, vector<8x128xf32> -> vector<8x128xf32>
    %15 = vector.broadcast %2 : vector<1x128xf32> to vector<8x128xf32>
    %16 = arith.addf %14, %15 : vector<8x128xf32>
    %cst_9 = arith.constant 0.000000e+00 : f32
    %17 = vector.broadcast %cst_9 : f32 to vector<8x128xf32>
    %18 = arith.maximumf %16, %17 : vector<8x128xf32>
    %19 = arith.truncf %18 : vector<8x128xf32> to vector<8x128xbf16>
    %c0_10 = arith.constant 0 : index
    %c0_11 = arith.constant 0 : index
    %20 = vector.load %arg4[%c0_10, %c0_11] : memref<128x8xbf16, #tpu.memory_space<vmem>>, vector<128x8xbf16>
    %cst_12 = arith.constant dense<0.000000e+00> : vector<8x8xf32>
    %21 = tpu.matmul %19, %20, %cst_12 {dimension_numbers = #tpu.dot_dimension_numbers<[1], [0], [0], [1], [0, 0, 1, 1], [], []>} : vector<8x128xbf16>, vector<128x8xbf16>, vector<8x8xf32> -> vector<8x8xf32>
    %22 = vector.broadcast %3 : vector<1x8xf32> to vector<8x8xf32>
    %23 = arith.addf %21, %22 : vector<8x8xf32>
    %c0_13 = arith.constant 0 : index
    %c0_14 = arith.constant 0 : index
    %24 = vector.load %arg5[%c0_13, %c0_14] : memref<8x8xf32, #tpu.memory_space<vmem>>, vector<8x8xf32>
    tpu.vector_store %arg5[%c0_13, %c0_14], %23 {strides = array<i32>} : memref<8x8xf32, #tpu.memory_space<vmem>>, vector<8x8xf32>,
    return
  }
  func.func @transform_0(%arg0: i32) -> (i32, i32) {
    %c0_i32 = arith.constant 0 : i32
    %c0_i32_0 = arith.constant 0 : i32
    return %arg0, %c0_i32 : i32, i32
  }
  func.func @transform_1(%arg0: i32) -> (i32, i32) {
    %c0_i32 = arith.constant 0 : i32
    %c0_i32_0 = arith.constant 0 : i32
    %c0_i32_1 = arith.constant 0 : i32
    return %c0_i32, %c0_i32_0 : i32, i32
  }
  func.func @transform_2(%arg0: i32) -> (i32, i32) {
    %c0_i32 = arith.constant 0 : i32
    %c0_i32_0 = arith.constant 0 : i32
    %c0_i32_1 = arith.constant 0 : i32
    return %c0_i32, %c0_i32_0 : i32, i32
  }
  func.func @transform_3(%arg0: i32) -> (i32, i32) {
    %c0_i32 = arith.constant 0 : i32
    %c0_i32_0 = arith.constant 0 : i32
    %c0_i32_1 = arith.constant 0 : i32
    return %c0_i32, %c0_i32_0 : i32, i32
  }
  func.func @transform_4(%arg0: i32) -> (i32, i32) {
    %c0_i32 = arith.constant 0 : i32
    %c0_i32_0 = arith.constant 0 : i32
    return %arg0, %c0_i32 : i32, i32
  }
}

</mosaic_0001>

<llo_original>
// kernel: tpu_custom_call.1
$region0: #{tpu_custom_call.1}
  #allocation0 [shape = 'u32[]', space=smem, size = 0x4, offset = 0x4, fixed_abs, tag = 'smem constant byte address 0x4 - core index']
  #allocation1 [shape = 'u32[144,128]{1,0:T(1,128)}', space=vmem, size = 0x12000, scoped, tag = 'internal scratch']
  %s0 = inlined_call_operand.vmem [shape: f32[8,1], index: 0, kind: input, shape index: {}]
  %s1 = inlined_call_operand.vmem [shape: f32[8,128], index: 1, kind: input, shape index: {}]
  %s2 = inlined_call_operand.vmem [shape: bf16[128,128], index: 2, kind: input, shape index: {}]
  %s3 = inlined_call_operand.vmem [shape: bf16[128,8], index: 3, kind: input, shape index: {}]
  %s4 = inlined_call_operand.hbm [shape: f32[8,8], index: 4, kind: output, shape index: {}]
  %s5 = sld [smem:[#allocation0]]
  $region26: #{tpu_custom_call.1} parent=0
    _
  %s7 = ssub.s32 1, %s5
  %s8 = scalar_select 0, %s7, %s5
  $region1: #{tpu_custom_call.1} parent=0
    #allocation2 [shape = 'u8[4096]{0}', space=vmem, size = 0x1000, scoped, tag = 'output window, operand 0, single buffered']
    #allocation3 [shape = 's32[1]{0}', space=sflag, size = 0x4, scoped, tag = 'scoped memory for tpu_custom_call.1']
    %9 = vsyncpa [#allocation3], 0
    // Predicated region
    $region2: #{tpu_custom_call.1} parent=1 // pred_check
      _
    $region3: #{tpu_custom_call.1} parent=1 // pred_check_branch
      %11 = sbr.rel (0) target = $region5
    $region4: #{tpu_custom_call.1} parent=1 // pred_region
      _
    $region5: #{tpu_custom_call.1} parent=1 // pred_fallthru
      _
    // Predicated region
    $region6: #{tpu_custom_call.1} parent=1 // pred_check
      _
    $region7: #{tpu_custom_call.1} parent=1 // pred_check_branch
      %13 = sbr.rel (0) target = $region9
    $region8: #{tpu_custom_call.1} parent=1 // pred_region
      _
    $region9: #{tpu_custom_call.1} parent=1 // pred_fallthru
      _
    // Predicated region
    $region10: #{tpu_custom_call.1} parent=1 // pred_check
      _
    $region11: #{tpu_custom_call.1} parent=1 // pred_check_branch
      %15 = sbr.rel (0) target = $region13
    $region12: #{tpu_custom_call.1} parent=1 // pred_region
      _
    $region13: #{tpu_custom_call.1} parent=1 // pred_fallthru
      _
    // Predicated region
    $region14: #{tpu_custom_call.1} parent=1 // pred_check
      _
    $region15: #{tpu_custom_call.1} parent=1 // pred_check_branch
      %17 = sbr.rel (0) target = $region17
    $region16: #{tpu_custom_call.1} parent=1 // pred_region
      _
    $region17: #{tpu_custom_call.1} parent=1 // pred_fallthru
      _
    %v19 = vld [vmem:[%s1] sm:$0x1]
    %v20 = vld [vmem:[%s1 + $0x1] sm:$0x1]
    %v21 = vld [vmem:[%s1 + $0x2] sm:$0x1]
    %v22 = vld [vmem:[%s1 + $0x3] sm:$0x1]
    %v23 = vld [vmem:[%s0] sm:$0xff]
    %25 = vset.pattern.permute.xlu0 0
    %26 = vperm.xlu0 %25, %v23
    %v27 = vpop.permute.xlu0 %26
    %v29 = vlaneseq
    %v30 = vshrl.u32 %v29, 7
    %v31 = vsub.s32 0, %v30
    %v32 = vrot.slane %v19, %v31
    %v33 = vmul.f32 %v27, %v32
    %v34 = vlaneseq
    %v35 = vshrl.u32 %v34, 7
    %v36 = vsub.s32 0, %v35
    %v37 = vrot.slane %v20, %v36
    %v38 = vadd.f32 %v33, %v37
    %v39 = vmax.f32 %v38, 0.0
    %v40 = vpack.c.bf16 %v39, %v39
    %v41 = vld [vmem:[%s2] sm:$0xf]
    %v42 = vld [vmem:[%s2 + $0x4] sm:$0xf]
    %v43 = vld [vmem:[%s2 + $0x8] sm:$0xf]
    %v44 = vld [vmem:[%s2 + $0xc] sm:$0xf]
    %v45 = vld [vmem:[%s2 + $0x10] sm:$0xf]
    %v46 = vld [vmem:[%s2 + $0x14] sm:$0xf]
    %v47 = vld [vmem:[%s2 + $0x18] sm:$0xf]
    %v48 = vld [vmem:[%s2 + $0x1c] sm:$0xf]
    %v49 = vld [vmem:[%s2 + $0x20] sm:$0xf]
    %v50 = vld [vmem:[%s2 + $0x24] sm:$0xf]
    %v51 = vld [vmem:[%s2 + $0x28] sm:$0xf]
    %v52 = vld [vmem:[%s2 + $0x2c] sm:$0xf]
    %v53 = vld [vmem:[%s2 + $0x30] sm:$0xf]
    %v54 = vld [vmem:[%s2 + $0x34] sm:$0xf]
    %v55 = vld [vmem:[%s2 + $0x38] sm:$0xf]
    %v56 = vld [vmem:[%s2 + $0x3c] sm:$0xf]
    %v57 = vlaneseq
    %v58 = vshrl.u32 %v57, 7
    %v59 = vsub.s32 0, %v58
    %v60 = vrot.slane %v21, %v59
    %v77 = vunpack.c.l.b16 %v41
    %v78 = vunpack.c.l.b16 %v42
    %v79 = vunpack.c.l.b16 %v43
    %v80 = vunpack.c.l.b16 %v44
    %v81 = vunpack.c.l.b16 %v45
    %v82 = vunpack.c.l.b16 %v46
    %v83 = vunpack.c.l.b16 %v47
    %v84 = vunpack.c.l.b16 %v48
    %v85 = vunpack.c.l.b16 %v49
    %v86 = vunpack.c.l.b16 %v50
    %v87 = vunpack.c.l.b16 %v51
    %v88 = vunpack.c.l.b16 %v52
    %v89 = vunpack.c.l.b16 %v53
    %v90 = vunpack.c.l.b16 %v54
    %v91 = vunpack.c.l.b16 %v55
    %v92 = vunpack.c.l.b16 %v56
    %v93 = vpack.c.b16 %v78, %v77
    %v94 = vpack.c.b16 %v80, %v79
    %v95 = vpack.c.b16 %v82, %v81
    %v96 = vpack.c.b16 %v84, %v83
    %v97 = vpack.c.b16 %v86, %v85
    %v98 = vpack.c.b16 %v88, %v87
    %v99 = vpack.c.b16 %v90, %v89
    %v100 = vpack.c.b16 %v92, %v91
    %109 = vmatprep.subr.bf16.mxu0 0
    %110 = vmatpush1.bf16.msra.mxu0 %v93
    %111 = vmatprep.subr.bf16.mxu0 0
    %112 = vmatpush1.bf16.msra.mxu0 %v94
    %113 = vmatprep.subr.bf16.mxu0 0
    %114 = vmatpush1.bf16.msra.mxu0 %v95
    %115 = vmatprep.subr.bf16.mxu0 0
    %116 = vmatpush1.bf16.msra.mxu0 %v96
    %117 = vmatprep.subr.bf16.mxu0 0
    %118 = vmatpush1.bf16.msra.mxu0 %v97
    %119 = vmatprep.subr.bf16.mxu0 0
    %120 = vmatpush1.bf16.msra.mxu0 %v98
    %121 = vmatprep.subr.bf16.mxu0 0
    %122 = vmatpush1.bf16.msra.mxu0 %v99
    %123 = vmatprep.subr.bf16.mxu0 0
    %124 = vmatpush1.bf16.msra.mxu0 %v100
    %125 = vmatprep.subr.bf16.mxu0 0
    %126 = vmatpush1.bf16.msra.mxu0 0
    %127 = vmatprep.subr.bf16.mxu0 0
    %128 = vmatpush1.bf16.msra.mxu0 0
    %129 = vmatprep.subr.bf16.mxu0 0
    %130 = vmatpush1.bf16.msra.mxu0 0
    %131 = vmatprep.subr.bf16.mxu0 0
    %132 = vmatpush1.bf16.msra.mxu0 0
    %133 = vmatprep.subr.bf16.mxu0 0
    %134 = vmatpush1.bf16.msra.mxu0 0
    %135 = vmatprep.subr.bf16.mxu0 0
    %136 = vmatpush1.bf16.msra.mxu0 0
    %137 = vmatprep.subr.bf16.mxu0 0
    %138 = vmatpush1.bf16.msra.mxu0 0
    %139 = vmatprep.subr.bf16.mxu0 0
    %140 = vmatpush1.bf16.msra.mxu0 0
    %141 = vmatprep.mubr.bf16.mxu0 0
    %142 = vmatmul.mubr.bf16.gmra.mrb[0].mxu0 %v40
    %v143 = vpop.f32.mrb[0].mxu0
    %v144 = vadd.f32 %v60, %v143
    %v145 = vpop.f32.mrb[0].mxu0
    %v146 = vpop.f32.mrb[0].mxu0
    %v147 = vpop.f32.mrb[0].mxu0
    %148 = vdwg.mxu0
    %v149 = vmax.f32 %v144, 0.0
    %v150 = vpack.c.bf16 %v149, %v149
    %v151 = vld [vmem:[%s3] sm:$0xf]
    %v152 = vld [vmem:[%s3 + $0x4] sm:$0xf]
    %v153 = vld [vmem:[%s3 + $0x8] sm:$0xf]
    %v154 = vld [vmem:[%s3 + $0xc] sm:$0xf]
    %v155 = vld [vmem:[%s3 + $0x10] sm:$0xf]
    %v156 = vld [vmem:[%s3 + $0x14] sm:$0xf]
    %v157 = vld [vmem:[%s3 + $0x18] sm:$0xf]
    %v158 = vld [vmem:[%s3 + $0x1c] sm:$0xf]
    %v159 = vld [vmem:[%s3 + $0x20] sm:$0xf]
    %v160 = vld [vmem:[%s3 + $0x24] sm:$0xf]
    %v161 = vld [vmem:[%s3 + $0x28] sm:$0xf]
    %v162 = vld [vmem:[%s3 + $0x2c] sm:$0xf]
    %v163 = vld [vmem:[%s3 + $0x30] sm:$0xf]
    %v164 = vld [vmem:[%s3 + $0x34] sm:$0xf]
    %v165 = vld [vmem:[%s3 + $0x38] sm:$0xf]
    %v166 = vld [vmem:[%s3 + $0x3c] sm:$0xf]
    %v167 = vlaneseq
    %v168 = vshrl.u32 %v167, 7
    %v169 = vsub.s32 0, %v168
    %v170 = vrot.slane %v22, %v169
    %v187 = vunpack.c.l.b16 %v151
    %v188 = vunpack.c.l.b16 %v152
    %v189 = vunpack.c.l.b16 %v153
    %v190 = vunpack.c.l.b16 %v154
    %v191 = vunpack.c.l.b16 %v155
    %v192 = vunpack.c.l.b16 %v156
    %v193 = vunpack.c.l.b16 %v157
    %v194 = vunpack.c.l.b16 %v158
    %v195 = vunpack.c.l.b16 %v159
    %v196 = vunpack.c.l.b16 %v160
    %v197 = vunpack.c.l.b16 %v161
    %v198 = vunpack.c.l.b16 %v162
    %v199 = vunpack.c.l.b16 %v163
    %v200 = vunpack.c.l.b16 %v164
    %v201 = vunpack.c.l.b16 %v165
    %v202 = vunpack.c.l.b16 %v166
    %v203 = vpack.c.b16 %v188, %v187
    %v204 = vpack.c.b16 %v190, %v189
    %v205 = vpack.c.b16 %v192, %v191
    %v206 = vpack.c.b16 %v194, %v193
    %v207 = vpack.c.b16 %v196, %v195
    %v208 = vpack.c.b16 %v198, %v197
    %v209 = vpack.c.b16 %v200, %v199
    %v210 = vpack.c.b16 %v202, %v201
    %219 = vmatprep.subr.bf16.mxu0 0
    %220 = vmatpush1.bf16.msra.mxu0 %v203
    %221 = vmatprep.subr.bf16.mxu0 0
    %222 = vmatpush1.bf16.msra.mxu0 %v204
    %223 = vmatprep.subr.bf16.mxu0 0
    %224 = vmatpush1.bf16.msra.mxu0 %v205
    %225 = vmatprep.subr.bf16.mxu0 0
    %226 = vmatpush1.bf16.msra.mxu0 %v206
    %227 = vmatprep.subr.bf16.mxu0 0
    %228 = vmatpush1.bf16.msra.mxu0 %v207
    %229 = vmatprep.subr.bf16.mxu0 0
    %230 = vmatpush1.bf16.msra.mxu0 %v208
    %231 = vmatprep.subr.bf16.mxu0 0
    %232 = vmatpush1.bf16.msra.mxu0 %v209
    %233 = vmatprep.subr.bf16.mxu0 0
    %234 = vmatpush1.bf16.msra.mxu0 %v210
    %235 = vmatprep.subr.bf16.mxu0 0
    %236 = vmatpush1.bf16.msra.mxu0 0
    %237 = vmatprep.subr.bf16.mxu0 0
    %238 = vmatpush1.bf16.msra.mxu0 0
    %239 = vmatprep.subr.bf16.mxu0 0
    %240 = vmatpush1.bf16.msra.mxu0 0
    %241 = vmatprep.subr.bf16.mxu0 0
    %242 = vmatpush1.bf16.msra.mxu0 0
    %243 = vmatprep.subr.bf16.mxu0 0
    %244 = vmatpush1.bf16.msra.mxu0 0
    %245 = vmatprep.subr.bf16.mxu0 0
    %246 = vmatpush1.bf16.msra.mxu0 0
    %247 = vmatprep.subr.bf16.mxu0 0
    %248 = vmatpush1.bf16.msra.mxu0 0
    %249 = vmatprep.subr.bf16.mxu0 0
    %250 = vmatpush1.bf16.msra.mxu0 0
    %251 = vmatprep.mubr.bf16.mxu0 0
    %252 = vmatmul.mubr.bf16.gmra.mrb[0].mxu0 %v150
    %v253 = vpop.f32.mrb[0].mxu0
    %v254 = vadd.f32 %v170, %v253
    %v255 = vpop.f32.mrb[0].mxu0
    %v256 = vpop.f32.mrb[0].mxu0
    %v257 = vpop.f32.mrb[0].mxu0
    %258 = vdwg.mxu0
    %vm259 = vcmask 64512
    %260 = vst.msk [vmem:[#allocation2] sm:$0xff] %vm259, %v254
    // Predicated region
    $region18: #{tpu_custom_call.1} parent=1 // pred_check
      _
    $region19: #{tpu_custom_call.1} parent=1 // pred_check_branch
      %262 = sbr.rel (0) target = $region21
    $region20: #{tpu_custom_call.1} parent=1 // pred_region
      %s264 = ssub.s32 128, 128
      %265 = vsyncadd [#allocation3], %s264
      %s267 = sshll.u32 [#allocation2], 4
      %s268 = int_to_ptr.vmem [resolvable:$true] %s267
      %270 = dma.vmem_to_hbm [thread:$0]  %s268, 128, %s4, [#allocation3]
    $region21: #{tpu_custom_call.1} parent=1 // pred_fallthru
      _
    // Predicated region
    $region22: #{tpu_custom_call.1} parent=1 // pred_check
      _
    $region23: #{tpu_custom_call.1} parent=1 // pred_check_branch
      %272 = sbr.rel (0) target = $region25
    $region24: #{tpu_custom_call.1} parent=1 // pred_region
      %273 = dma.done [#allocation3], 128
    $region25: #{tpu_custom_call.1} parent=1 // pred_fallthru
      _
    %274 = vsyncpa [#allocation3], 1

</llo_original>
